<compile_context>
chip_gen: v7x
topology: tpu7x:2x2x1
jax: 0.10.0
libtpu: 0.0.40
codegen_flags: <defaults>
</compile_context>

<pallas_src>
import functools

import jax
import jax.numpy as jnp
from jax.experimental import pallas as pl
from jax.experimental.pallas import tpu as pltpu


def _round_up(x, m):
    return -(-x // m) * m


def _c3c2_kernel(xf_ref, w_ref, b_ref, o_ref, rhs_ref, *, ws, p):
    # xf_ref : (1, Cin, S)    one zero-padded, flattened image (channels-first)
    # w_ref  : (Cout, 9*Cin)  folded (w1+w2), K-stacked taps
    # b_ref  : (Cout, 1)      folded bias (b1+b2)
    # o_ref  : (1, Cout, Pp)  lane-dense output slab (Pp multiple of 128)
    # rhs_ref: (9*Cin, Pp)    VMEM scratch: im2col-stacked RHS
    cin = xf_ref.shape[1]
    k9, pp = rhs_ref.shape

    xf = xf_ref[0]                                   # (Cin, S)

    # im2col: each 3x3 tap is one static lane-offset slice of the flattened
    # padded image; pay the lane shift once, then matmul on aligned data.
    for dy in range(3):
        for dx in range(3):
            t = dy * 3 + dx
            off = dy * ws + dx
            rhs_ref[t * cin:(t + 1) * cin, :p] = xf[:, off:off + p]
    if pp > p:
        # Keep the lane-pad columns deterministic (they are dropped wrapper-side).
        rhs_ref[:, p:] = jnp.zeros((k9, pp - p), dtype=rhs_ref.dtype)

    # One K = 9*Cin matmul; accumulation lives inside the MXU.
    acc = jnp.dot(w_ref[...], rhs_ref[...], preferred_element_type=jnp.float32)

    # f32 bias + ReLU epilogue, single dense (Cout, Pp) store.
    o_ref[0] = jnp.maximum(acc + b_ref[...], 0.0)


def c3c2_forward(x, w1, b1, w2, b2, *, compute_dtype=jnp.float32):
    """relu(conv1(x) + conv2(x)) with both convs 3x3, stride 1, padding 1.

    x: (N, Cin, H, W); w*: (Cout, Cin, 3, 3); b*: (Cout,).
    Returns (N, Cout, H, W) float32.
    """
    N, Cin, H, W = x.shape
    Cout = w1.shape[0]

    Ws = W + 2                     # padded row stride
    Hp = H + 3                     # rows: 1 top pad + H + 2 bottom pad
    S = Hp * Ws                    # flat length per padded image
    P = H * Ws                     # output positions per image (incl. junk cols)
    Pp = _round_up(P, 128)         # lane-dense output width
    K9 = 9 * Cin
    # Largest tap offset must stay inside the padded image (no OOB reads).
    assert 2 * Ws + 2 + P <= S

    # Fold the two convolutions (exact: identical stride/padding):
    #   conv1(x) + conv2(x) == conv(x, w1 + w2) + (b1 + b2)
    # K-stack folded weights so kernel-side K index = (dy*3+dx)*Cin + c.
    w_sum = (w1 + w2).astype(jnp.float32)                       # (Cout, Cin, 3, 3)
    w_flat = jnp.transpose(w_sum, (0, 2, 3, 1)).reshape(Cout, K9)
    w_flat = w_flat.astype(compute_dtype)
    b_sum = (b1 + b2).astype(jnp.float32).reshape(Cout, 1)

    # Single pad, stay NCHW: over-pad H so the flattened image already covers
    # every tap offset (no second flat-axis pad, no layout transpose).
    xp = jnp.pad(x.astype(compute_dtype), ((0, 0), (0, 0), (1, 2), (1, 1)))
    xf = xp.reshape(N, Cin, S)

    kernel = functools.partial(_c3c2_kernel, ws=Ws, p=P)

    out_flat = pl.pallas_call(
        kernel,
        out_shape=jax.ShapeDtypeStruct((N, Cout, Pp), jnp.float32),
        grid_spec=pltpu.PrefetchScalarGridSpec(
            num_scalar_prefetch=0,
            grid=(N,),
            in_specs=[
                pl.BlockSpec((1, Cin, S), lambda g: (g, 0, 0)),
                pl.BlockSpec((Cout, K9), lambda g: (0, 0)),
                pl.BlockSpec((Cout, 1), lambda g: (0, 0)),
            ],
            out_specs=pl.BlockSpec((1, Cout, Pp), lambda g: (g, 0, 0)),
            scratch_shapes=[pltpu.VMEM((K9, Pp), compute_dtype)],
        ),
        compiler_params=pltpu.CompilerParams(
            dimension_semantics=("parallel",),
            vmem_limit_bytes=32 * 1024 * 1024),
    )(xf, w_flat, b_sum)

    # (N, Cout, Pp) -> drop lane pad -> (N, Cout, H, Ws) -> drop junk width
    # columns.  Already NCHW: no transpose.
    return out_flat[:, :, :P].reshape(N, Cout, H, Ws)[:, :, :, :W]


def _reference(x, w1, b1, w2, b2):
    """Pure-JAX reference using lax.conv_general_dilated (NCHW / OIHW)."""
    def conv(x, w, b):
        y = jax.lax.conv_general_dilated(
            x, w, window_strides=(1, 1), padding=((1, 1), (1, 1)),
            dimension_numbers=("NCHW", "OIHW", "NCHW"))
        return y + b.reshape(1, -1, 1, 1)
    return jax.nn.relu(conv(x, w1, b1) + conv(x, w2, b2))


if __name__ == "__main__":
    key = jax.random.PRNGKey(0)
    N, Cin, Cout, H, W = 2, 4, 4, 16, 16

    k_x, k_w1, k_b1, k_w2, k_b2 = jax.random.split(key, 5)
    x = jax.random.normal(k_x, (N, Cin, H, W), dtype=jnp.float32)
    # Parameter layouts match nn.Conv2d(Cin, Cout, 3, padding=1):
    #   weight (Cout, Cin, 3, 3), bias (Cout,).
    w1 = jax.random.normal(k_w1, (Cout, Cin, 3, 3), dtype=jnp.float32) * 0.1
    b1 = jax.random.normal(k_b1, (Cout,), dtype=jnp.float32) * 0.1
    w2 = jax.random.normal(k_w2, (Cout, Cin, 3, 3), dtype=jnp.float32) * 0.1
    b2 = jax.random.normal(k_b2, (Cout,), dtype=jnp.float32) * 0.1

    out = jax.block_until_ready(c3c2_forward(x, w1, b1, w2, b2))
    ref = jax.block_until_ready(_reference(x, w1, b1, w2, b2))

    assert out.shape == (N, Cout, H, W)
    assert jnp.allclose(out, ref, atol=1e-4, rtol=1e-4), (
        "max abs err = %g" % float(jnp.max(jnp.abs(out - ref))))

    print("KERNEL_OK")
</pallas_src>

<mosaic_0001>
module attributes {stable_mosaic.version = 11 : i64} {
  func.func @_c3c2_kernel(%arg0: i32, %arg1: memref<1x4x342xf32, #tpu.memory_space<vmem>>, %arg2: memref<4x36xf32, #tpu.memory_space<vmem>>, %arg3: memref<4x1xf32, #tpu.memory_space<vmem>>, %arg4: memref<1x4x384xf32, #tpu.memory_space<vmem>>, %arg5: memref<36x384xf32, #tpu.memory_space<vmem>>) attributes {dimension_semantics = [#tpu.dimension_semantics<parallel>], iteration_bounds = array<i64: 2>, scalar_prefetch = 0 : i64, scratch_operands = 1 : i64, tpu.core_type = #tpu.core_type<tc>, window_params = [{transform_indices = @transform_0, window_bounds = array<i64: 1, 4, 342>}, {pipeline_mode = #tpu.pipeline_mode<synchronous>, transform_indices = @transform_1, window_bounds = array<i64: 4, 36>}, {pipeline_mode = #tpu.pipeline_mode<synchronous>, transform_indices = @transform_2, window_bounds = array<i64: 4, 1>}, {transform_indices = @transform_3, window_bounds = array<i64: 1, 4, 384>}]} {
    %c0 = arith.constant 0 : index
    %c0_0 = arith.constant 0 : index
    %c0_1 = arith.constant 0 : index
    %0 = vector.load %arg1[%c0, %c0_0, %c0_1] : memref<1x4x342xf32, #tpu.memory_space<vmem>>, vector<1x4x342xf32>
    %1 = vector.shape_cast %0 : vector<1x4x342xf32> to vector<4x342xf32>
    %2 = vector.extract_strided_slice %1 {offsets = [0, 0], sizes = [4, 288], strides = [1, 1]} : vector<4x342xf32> to vector<4x288xf32>
    %c0_2 = arith.constant 0 : index
    %c0_3 = arith.constant 0 : index
    %3 = vector.load %arg5[%c0_2, %c0_3] : memref<36x384xf32, #tpu.memory_space<vmem>>, vector<4x288xf32>
    tpu.vector_store %arg5[%c0_2, %c0_3], %2 {strides = array<i32>} : memref<36x384xf32, #tpu.memory_space<vmem>>, vector<4x288xf32>,
    %4 = vector.extract_strided_slice %1 {offsets = [0, 1], sizes = [4, 288], strides = [1, 1]} : vector<4x342xf32> to vector<4x288xf32>
    %c4 = arith.constant 4 : index
    %c0_4 = arith.constant 0 : index
    %5 = vector.load %arg5[%c4, %c0_4] : memref<36x384xf32, #tpu.memory_space<vmem>>, vector<4x288xf32>
    tpu.vector_store %arg5[%c4, %c0_4], %4 {strides = array<i32>} : memref<36x384xf32, #tpu.memory_space<vmem>>, vector<4x288xf32>,
    %6 = vector.extract_strided_slice %1 {offsets = [0, 2], sizes = [4, 288], strides = [1, 1]} : vector<4x342xf32> to vector<4x288xf32>
    %c8 = arith.constant 8 : index
    %c0_5 = arith.constant 0 : index
    %7 = vector.load %arg5[%c8, %c0_5] : memref<36x384xf32, #tpu.memory_space<vmem>>, vector<4x288xf32>
    tpu.vector_store %arg5[%c8, %c0_5], %6 {strides = array<i32>} : memref<36x384xf32, #tpu.memory_space<vmem>>, vector<4x288xf32>,
    %8 = vector.extract_strided_slice %1 {offsets = [0, 18], sizes = [4, 288], strides = [1, 1]} : vector<4x342xf32> to vector<4x288xf32>
    %c12 = arith.constant 12 : index
    %c0_6 = arith.constant 0 : index
    %9 = vector.load %arg5[%c12, %c0_6] : memref<36x384xf32, #tpu.memory_space<vmem>>, vector<4x288xf32>
    tpu.vector_store %arg5[%c12, %c0_6], %8 {strides = array<i32>} : memref<36x384xf32, #tpu.memory_space<vmem>>, vector<4x288xf32>,
    %10 = vector.extract_strided_slice %1 {offsets = [0, 19], sizes = [4, 288], strides = [1, 1]} : vector<4x342xf32> to vector<4x288xf32>
    %c16 = arith.constant 16 : index
    %c0_7 = arith.constant 0 : index
    %11 = vector.load %arg5[%c16, %c0_7] : memref<36x384xf32, #tpu.memory_space<vmem>>, vector<4x288xf32>
    tpu.vector_store %arg5[%c16, %c0_7], %10 {strides = array<i32>} : memref<36x384xf32, #tpu.memory_space<vmem>>, vector<4x288xf32>,
    %12 = vector.extract_strided_slice %1 {offsets = [0, 20], sizes = [4, 288], strides = [1, 1]} : vector<4x342xf32> to vector<4x288xf32>
    %c20 = arith.constant 20 : index
    %c0_8 = arith.constant 0 : index
    %13 = vector.load %arg5[%c20, %c0_8] : memref<36x384xf32, #tpu.memory_space<vmem>>, vector<4x288xf32>
    tpu.vector_store %arg5[%c20, %c0_8], %12 {strides = array<i32>} : memref<36x384xf32, #tpu.memory_space<vmem>>, vector<4x288xf32>,
    %14 = vector.extract_strided_slice %1 {offsets = [0, 36], sizes = [4, 288], strides = [1, 1]} : vector<4x342xf32> to vector<4x288xf32>
    %c24 = arith.constant 24 : index
    %c0_9 = arith.constant 0 : index
    %15 = vector.load %arg5[%c24, %c0_9] : memref<36x384xf32, #tpu.memory_space<vmem>>, vector<4x288xf32>
    tpu.vector_store %arg5[%c24, %c0_9], %14 {strides = array<i32>} : memref<36x384xf32, #tpu.memory_space<vmem>>, vector<4x288xf32>,
    %16 = vector.extract_strided_slice %1 {offsets = [0, 37], sizes = [4, 288], strides = [1, 1]} : vector<4x342xf32> to vector<4x288xf32>
    %c28 = arith.constant 28 : index
    %c0_10 = arith.constant 0 : index
    %17 = vector.load %arg5[%c28, %c0_10] : memref<36x384xf32, #tpu.memory_space<vmem>>, vector<4x288xf32>
    tpu.vector_store %arg5[%c28, %c0_10], %16 {strides = array<i32>} : memref<36x384xf32, #tpu.memory_space<vmem>>, vector<4x288xf32>,
    %18 = vector.extract_strided_slice %1 {offsets = [0, 38], sizes = [4, 288], strides = [1, 1]} : vector<4x342xf32> to vector<4x288xf32>
    %c32 = arith.constant 32 : index
    %c0_11 = arith.constant 0 : index
    %19 = vector.load %arg5[%c32, %c0_11] : memref<36x384xf32, #tpu.memory_space<vmem>>, vector<4x288xf32>
    tpu.vector_store %arg5[%c32, %c0_11], %18 {strides = array<i32>} : memref<36x384xf32, #tpu.memory_space<vmem>>, vector<4x288xf32>,
    %cst = arith.constant 0.000000e+00 : f32
    %20 = vector.broadcast %cst : f32 to vector<36x96xf32>
    %c0_12 = arith.constant 0 : index
    %c288 = arith.constant 288 : index
    %21 = vector.load %arg5[%c0_12, %c288] : memref<36x384xf32, #tpu.memory_space<vmem>>, vector<36x96xf32>
    tpu.vector_store %arg5[%c0_12, %c288], %20 {strides = array<i32>} : memref<36x384xf32, #tpu.memory_space<vmem>>, vector<36x96xf32>,
    %c0_13 = arith.constant 0 : index
    %c0_14 = arith.constant 0 : index
    %22 = vector.load %arg2[%c0_13, %c0_14] : memref<4x36xf32, #tpu.memory_space<vmem>>, vector<4x36xf32>
    %c0_15 = arith.constant 0 : index
    %c0_16 = arith.constant 0 : index
    %23 = vector.load %arg5[%c0_15, %c0_16] : memref<36x384xf32, #tpu.memory_space<vmem>>, vector<36x384xf32>
    %cst_17 = arith.constant dense<0.000000e+00> : vector<4x384xf32>
    %24 = tpu.matmul %22, %23, %cst_17 {dimension_numbers = #tpu.dot_dimension_numbers<[1], [0], [0], [1], [0, 0, 1, 1], [], []>} : vector<4x36xf32>, vector<36x384xf32>, vector<4x384xf32> -> vector<4x384xf32>
    %c0_18 = arith.constant 0 : index
    %c0_19 = arith.constant 0 : index
    %25 = vector.load %arg3[%c0_18, %c0_19] : memref<4x1xf32, #tpu.memory_space<vmem>>, vector<4x1xf32>
    %26 = vector.broadcast %25 : vector<4x1xf32> to vector<4x384xf32>
    %27 = arith.addf %24, %26 : vector<4x384xf32>
    %cst_20 = arith.constant 0.000000e+00 : f32
    %28 = vector.broadcast %cst_20 : f32 to vector<4x384xf32>
    %29 = arith.maximumf %27, %28 : vector<4x384xf32>
    %c0_21 = arith.constant 0 : index
    %c0_22 = arith.constant 0 : index
    %c0_23 = arith.constant 0 : index
    %30 = vector.load %arg4[%c0_21, %c0_22, %c0_23] : memref<1x4x384xf32, #tpu.memory_space<vmem>>, vector<1x4x384xf32>
    %31 = vector.shape_cast %30 : vector<1x4x384xf32> to vector<4x384xf32>
    %32 = vector.shape_cast %29 : vector<4x384xf32> to vector<1x4x384xf32>
    tpu.vector_store %arg4[%c0_21, %c0_22, %c0_23], %32 {strides = array<i32>} : memref<1x4x384xf32, #tpu.memory_space<vmem>>, vector<1x4x384xf32>,
    return
  }
  func.func @transform_0(%arg0: i32) -> (i32, i32, i32) {
    %c0_i32 = arith.constant 0 : i32
    %c0_i32_0 = arith.constant 0 : i32
    %c0_i32_1 = arith.constant 0 : i32
    return %arg0, %c0_i32, %c0_i32_0 : i32, i32, i32
  }
  func.func @transform_1(%arg0: i32) -> (i32, i32) {
    %c0_i32 = arith.constant 0 : i32
    %c0_i32_0 = arith.constant 0 : i32
    %c0_i32_1 = arith.constant 0 : i32
    return %c0_i32, %c0_i32_0 : i32, i32
  }
  func.func @transform_2(%arg0: i32) -> (i32, i32) {
    %c0_i32 = arith.constant 0 : i32
    %c0_i32_0 = arith.constant 0 : i32
    %c0_i32_1 = arith.constant 0 : i32
    return %c0_i32, %c0_i32_0 : i32, i32
  }
  func.func @transform_3(%arg0: i32) -> (i32, i32, i32) {
    %c0_i32 = arith.constant 0 : i32
    %c0_i32_0 = arith.constant 0 : i32
    %c0_i32_1 = arith.constant 0 : i32
    return %arg0, %c0_i32, %c0_i32_0 : i32, i32, i32
  }
}

</mosaic_0001>

<llo_original>
// kernel: tpu_custom_call.1
$region0: #{tpu_custom_call.1}
  #allocation0 [shape = 'u32[]', space=smem, size = 0x4, offset = 0x4, fixed_abs, tag = 'smem constant byte address 0x4 - core index']
  #allocation1 [shape = 'u32[144,128]{1,0:T(1,128)}', space=vmem, size = 0x12000, scoped, tag = 'internal scratch']
  #allocation2 [shape = 'f32[36,384]{1,0:T(8,128)}', space=vmem, size = 0xf000, scoped, tag = 'scratch operand']
  %s0 = inlined_call_operand.hbm [shape: f32[2,4,342], index: 0, kind: input, shape index: {}]
  %s1 = inlined_call_operand.vmem [shape: f32[4,36], index: 1, kind: input, shape index: {}]
  %s2 = inlined_call_operand.vmem [shape: f32[4,1], index: 2, kind: input, shape index: {}]
  %s3 = inlined_call_operand.hbm [shape: f32[2,4,384], index: 3, kind: output, shape index: {}]
  %s4 = sld [smem:[#allocation0]]
  $region49: #{tpu_custom_call.1} parent=0
    _
  %s6 = ssub.s32 1, %s4
  %s7 = scalar_select 0, %s6, %s4
  $region1: #{tpu_custom_call.1} parent=0
    #allocation3 [shape = 'u8[12288]{0}', space=vmem, size = 0x3000, scoped, tag = 'input window, operand 0']
    #allocation4 [shape = 's32[2]{0}', space=sflag, size = 0x8, scoped, tag = 'scoped memory for tpu_custom_call.1']
    #allocation5 [shape = 's32[2]{0}', space=sflag, size = 0x8, scoped, tag = 'scoped memory for tpu_custom_call.1']
    #allocation6 [shape = 'u8[12288]{0}', space=vmem, size = 0x3000, scoped, tag = 'output window, operand 0']
    %8 = vsyncpa [#allocation4], 0
    %s9 = scalar_lea.sflag [#allocation4], 1
    %10 = vsyncpa %s9, 0
    %11 = vsyncpa [#allocation5], 0
    %s12 = scalar_lea.sflag [#allocation5], 1
    %13 = vsyncpa %s12, 0
    loop: start=0, step=1, limit=4
    $region2: #{tpu_custom_call.1} parent=1 // loop_pre_header
      _
    $region3: #{tpu_custom_call.1} parent=1 // loop_header
      %s15 = sphi 0, %s19
      %p16 = scmp.ge.s32.totalorder %s15, 4
      %s25 = sphi 0, %s27
      %s28 = sphi 0, %s25
      %s29 = sphi 0, %s28
      %s45 = sphi 0, %s29
      %s49 = sphi 0, %s49
      %s51 = sphi 0, %s49
      %s52 = sphi 0, %s51
      %s66 = sphi 0, %s52
      %s70 = sphi 0, %s70
      %s72 = sphi 0, %s70
      %s73 = sphi 0, %s72
      %s87 = sphi 0, %s73
      %s93 = sphi 0, %s95
      %s96 = sphi 0, %s93
      %s97 = sphi 0, %s96
      %s113 = sphi 0, %s97
    $region4: #{tpu_custom_call.1} parent=1 // loop_header_branch
      %18 = sbr.rel (%p16) target = $region8
    $region5: #{tpu_custom_call.1} parent=1 // loop_body
      %s20 = ssub.s32 %s15, 1
      %s21 = ssub.s32 %s15, 2
      %s22 = sadd.s32 %s15, 1
      %s23 = ssub.s32 %s15, %s22
      %p24 = scmp.eq.s32.totalorder %s23, 0
      %s26 = sadd.s32 %s25, 1
      %s27 = scalar_select %p24, %s25, %s26
      %p30 = pneg %p24
      %p31 = scmp.eq.s32.totalorder %s15, 1
      %p32 = por %p30, %p31
      %p33 = scmp.ne.s32.totalorder %s25, %s28
      %p34 = scmp.eq.s32.totalorder %s15, 0
      %p35 = por %p33, %p34
      %p36 = scmp.ne.s32.totalorder %s25, %s28
      %p37 = scmp.eq.s32.totalorder %s20, 1
      %p38 = por %p36, %p37
      %p39 = scmp.ne.s32.totalorder %s28, %s29
      %p40 = scmp.eq.s32.totalorder %s20, 0
      %p41 = por %p39, %p40
      %p42 = scmp.ne.s32.totalorder %s28, %s29
      %p43 = scmp.eq.s32.totalorder %s21, 1
      %p44 = por %p42, %p43
      %p46 = scmp.ne.s32.totalorder %s29, %s45
      %p47 = scmp.eq.s32.totalorder %s21, 0
      %p48 = por %p46, %p47
      %s50 = sadd.s32 %s49, 1
      %p53 = scmp.eq.s32.totalorder %s15, 1
      %p54 = scmp.ne.s32.totalorder %s49, %s51
      %p55 = scmp.eq.s32.totalorder %s15, 0
      %p56 = por %p54, %p55
      %p57 = scmp.ne.s32.totalorder %s49, %s51
      %p58 = scmp.eq.s32.totalorder %s20, 1
      %p59 = por %p57, %p58
      %p60 = scmp.ne.s32.totalorder %s51, %s52
      %p61 = scmp.eq.s32.totalorder %s20, 0
      %p62 = por %p60, %p61
      %p63 = scmp.ne.s32.totalorder %s51, %s52
      %p64 = scmp.eq.s32.totalorder %s21, 1
      %p65 = por %p63, %p64
      %p67 = scmp.ne.s32.totalorder %s52, %s66
      %p68 = scmp.eq.s32.totalorder %s21, 0
      %p69 = por %p67, %p68
      %s71 = sadd.s32 %s70, 1
      %p74 = scmp.eq.s32.totalorder %s15, 1
      %p75 = scmp.ne.s32.totalorder %s70, %s72
      %p76 = scmp.eq.s32.totalorder %s15, 0
      %p77 = por %p75, %p76
      %p78 = scmp.ne.s32.totalorder %s70, %s72
      %p79 = scmp.eq.s32.totalorder %s20, 1
      %p80 = por %p78, %p79
      %p81 = scmp.ne.s32.totalorder %s72, %s73
      %p82 = scmp.eq.s32.totalorder %s20, 0
      %p83 = por %p81, %p82
      %p84 = scmp.ne.s32.totalorder %s72, %s73
      %p85 = scmp.eq.s32.totalorder %s21, 1
      %p86 = por %p84, %p85
      %p88 = scmp.ne.s32.totalorder %s73, %s87
      %p89 = scmp.eq.s32.totalorder %s21, 0
      %p90 = por %p88, %p89
      %s91 = ssub.s32 %s15, %s22
      %p92 = scmp.eq.s32.totalorder %s91, 0
      %s94 = sadd.s32 %s93, 1
      %s95 = scalar_select %p92, %s93, %s94
      %p98 = pneg %p92
      %p99 = scmp.eq.s32.totalorder %s15, 1
      %p100 = por %p98, %p99
      %p101 = scmp.ne.s32.totalorder %s93, %s96
      %p102 = scmp.eq.s32.totalorder %s15, 0
      %p103 = por %p101, %p102
      %p104 = scmp.ne.s32.totalorder %s93, %s96
      %p105 = scmp.eq.s32.totalorder %s20, 1
      %p106 = por %p104, %p105
      %p107 = scmp.ne.s32.totalorder %s96, %s97
      %p108 = scmp.eq.s32.totalorder %s20, 0
      %p109 = por %p107, %p108
      %p110 = scmp.ne.s32.totalorder %s96, %s97
      %p111 = scmp.eq.s32.totalorder %s21, 1
      %p112 = por %p110, %p111
      %p114 = scmp.ne.s32.totalorder %s97, %s113
      %p115 = scmp.eq.s32.totalorder %s21, 0
      %p116 = por %p114, %p115
      %p117 = scmp.le.s32.totalorder 1, %s15
      %p118 = scmp.lt.s32.totalorder %s15, 3
      %p119 = pnand %p117, %p118
      %p120 = pneg %p119
      // Predicated region
      $region9: #{tpu_custom_call.1} parent=5 // pred_check
        _
      $region10: #{tpu_custom_call.1} parent=5 // pred_check_branch
        %122 = sbr.rel (%p119) target = $region12
      $region11: #{tpu_custom_call.1} parent=5 // pred_region
        %s123 = ssub.s32 %s15, 1
        // Predicated region
        $region13: #{tpu_custom_call.1} parent=11 // pred_check
          %p124 = pneg %p62
        $region14: #{tpu_custom_call.1} parent=11 // pred_check_branch
          %126 = sbr.rel (%p124) target = $region16
        $region15: #{tpu_custom_call.1} parent=11 // pred_region
          _
        $region16: #{tpu_custom_call.1} parent=11 // pred_fallthru
          _
        // Predicated region
        $region17: #{tpu_custom_call.1} parent=11 // pred_check
          %p127 = pneg %p83
        $region18: #{tpu_custom_call.1} parent=11 // pred_check_branch
          %129 = sbr.rel (%p127) target = $region20
        $region19: #{tpu_custom_call.1} parent=11 // pred_region
          _
        $region20: #{tpu_custom_call.1} parent=11 // pred_fallthru
          _
      $region12: #{tpu_custom_call.1} parent=5 // pred_fallthru
        _
      %p130 = scmp.lt.s32.totalorder %s15, 2
      // Predicated region
      $region21: #{tpu_custom_call.1} parent=5 // pred_check
        %p131 = pneg %p130
      $region22: #{tpu_custom_call.1} parent=5 // pred_check_branch
        %133 = sbr.rel (%p131) target = $region24
      $region23: #{tpu_custom_call.1} parent=5 // pred_region
        // Predicated region
        $region25: #{tpu_custom_call.1} parent=23 // pred_check
          %p134 = pneg %p35
        $region26: #{tpu_custom_call.1} parent=23 // pred_check_branch
          %136 = sbr.rel (%p134) target = $region28
        $region27: #{tpu_custom_call.1} parent=23 // pred_region
          %s137 = sand.u32 %s25, 1
          %s138 = scalar_lea.sflag [#allocation4], %s137
          %s139 = sand.u32 %s25, 1
          %s140 = smul.addr %s139, 12
          %s141 = scalar_lea.vmem [#allocation3], %s140
          %s143 = ssub.s32 192, 192
          %144 = vsyncadd %s138, %s143
          %s145 = smul.addr %s15, 3
          %s146 = smul.addr %s145, 64
          %s147 = scalar_lea.hbm %s0, %s146
          %s149 = sshll.u32 %s141, 4
          %s150 = int_to_ptr.vmem [resolvable:$true] %s149
          %152 = dma.hbm_to_vmem [thread:$0]  %s147, 192, %s150, %s138
        $region28: #{tpu_custom_call.1} parent=23 // pred_fallthru
          _
      $region24: #{tpu_custom_call.1} parent=5 // pred_fallthru
        _
      %p153 = scmp.le.s32.totalorder 1, %s15
      %p154 = scmp.lt.s32.totalorder %s15, 3
      %p155 = pnand %p153, %p154
      %p156 = pneg %p155
      // Predicated region
      $region29: #{tpu_custom_call.1} parent=5 // pred_check
        _
      $region30: #{tpu_custom_call.1} parent=5 // pred_check_branch
        %158 = sbr.rel (%p155) target = $region32
      $region31: #{tpu_custom_call.1} parent=5 // pred_region
        %s159 = ssub.s32 %s15, 1
        %s160 = sand.u32 %s28, 1
        %s161 = scalar_lea.sflag [#allocation4], %s160
        %s162 = sand.u32 %s28, 1
        %s163 = smul.addr %s162, 12
        %s164 = scalar_lea.vmem [#allocation3], %s163
        // Predicated region
        $region33: #{tpu_custom_call.1} parent=31 // pred_check
          %p165 = pneg %p41
        $region34: #{tpu_custom_call.1} parent=31 // pred_check_branch
          %167 = sbr.rel (%p165) target = $region36
        $region35: #{tpu_custom_call.1} parent=31 // pred_region
          %168 = dma.done %s161, 192
        $region36: #{tpu_custom_call.1} parent=31 // pred_fallthru
          _
        %s169 = sand.u32 %s28, 1
        %s170 = scalar_lea.sflag [#allocation4], %s169
        %s171 = sand.u32 %s28, 1
        %s172 = smul.addr %s171, 12
        %s173 = scalar_lea.vmem [#allocation3], %s172
        %p174 = pneg %p41
        %p175 = pneg %p38
        %p176 = pneg %p62
        %p177 = pneg %p59
        %p178 = pneg %p83
        %p179 = pneg %p80
        %p180 = pneg %p109
        %p181 = pneg %p106
        %s182 = sand.u32 %s96, 1
        %s183 = scalar_lea.sflag [#allocation5], %s182
        %s184 = sand.u32 %s96, 1
        %s185 = smul.addr %s184, 12
        %s186 = scalar_lea.vmem [#allocation6], %s185
        %v187 = vld [vmem:[%s164] sm:$0xff]
        %v188 = vld [vmem:[%s164 + $0x8] sm:$0xf]
        %v191 = vcombine.high %v187, %v187
        %193 = vst [vmem:[#allocation2] sm:$0xf] %v187
        %194 = vst [vmem:[#allocation2 + $0x8] sm:$0xf] %v191
        %vm195 = vcmask 257024
        %196 = vst.msk [vmem:[#allocation2 + $0x10] sm:$0xf] %vm195, %v188
        %v197 = vcombine.low %v187, %v187
        %v198 = vcombine.low %v188, %v188
        %199 = vrot.lane.b32.xlu0 %v197, 127
        %v200 = vpop.permute.xlu0 %199
        %201 = vrot.lane.b32.xlu0 %v187, 127
        %v202 = vpop.permute.xlu0 %201
        %203 = vrot.lane.b32.xlu0 %v198, 127
        %v204 = vpop.permute.xlu0 %203
        %vm205 = vcmask 1039360
        %v206 = vsel %vm205, %v200, %v202
        %v207 = vsel %vm205, %v202, %v204
        %211 = vst [vmem:[#allocation2] sm:$0xf0] %v206
        %212 = vst [vmem:[#allocation2 + $0x8] sm:$0xf0] %v207
        %vm213 = vcmask 261124
        %214 = vst.msk [vmem:[#allocation2 + $0x10] sm:$0xf0] %vm213, %v204
        %215 = vrot.lane.b32.xlu0 %v187, 126
        %v216 = vpop.permute.xlu0 %215
        %217 = vrot.lane.b32.xlu0 %v191, 126
        %v218 = vpop.permute.xlu0 %217
        %219 = vrot.lane.b32.xlu0 %v188, 126
        %v220 = vpop.permute.xlu0 %219
        %vm221 = vcmask 1031168
        %v222 = vsel %vm221, %v216, %v218
        %v223 = vsel %vm221, %v218, %v220
        %227 = vst [vmem:[#allocation2 + $0x18] sm:$0xf] %v222
        %228 = vst [vmem:[#allocation2 + $0x20] sm:$0xf] %v223
        %229 = vst.msk [vmem:[#allocation2 + $0x28] sm:$0xf] %vm195, %v220
        %230 = vrot.lane.b32.xlu0 %v197, 110
        %v231 = vpop.permute.xlu0 %230
        %232 = vrot.lane.b32.xlu0 %v187, 110
        %v233 = vpop.permute.xlu0 %232
        %234 = vrot.lane.b32.xlu0 %v198, 110
        %v235 = vpop.permute.xlu0 %234
        %vm236 = vcmask 900096
        %v237 = vsel %vm236, %v231, %v233
        %v238 = vsel %vm236, %v233, %v235
        %242 = vst [vmem:[#allocation2 + $0x18] sm:$0xf0] %v237
        %243 = vst [vmem:[#allocation2 + $0x20] sm:$0xf0] %v238
        %244 = vst.msk [vmem:[#allocation2 + $0x28] sm:$0xf0] %vm213, %v235
        %245 = vrot.lane.b32.xlu0 %v187, 109
        %v246 = vpop.permute.xlu0 %245
        %247 = vrot.lane.b32.xlu0 %v191, 109
        %v248 = vpop.permute.xlu0 %247
        %249 = vrot.lane.b32.xlu0 %v188, 109
        %v250 = vpop.permute.xlu0 %249
        %vm251 = vcmask 891904
        %v252 = vsel %vm251, %v246, %v248
        %v253 = vsel %vm251, %v248, %v250
        %257 = vst [vmem:[#allocation2 + $0x30] sm:$0xf] %v252
        %258 = vst [vmem:[#allocation2 + $0x38] sm:$0xf] %v253
        %259 = vst.msk [vmem:[#allocation2 + $0x40] sm:$0xf] %vm195, %v250
        %260 = vrot.lane.b32.xlu0 %v197, 108
        %v261 = vpop.permute.xlu0 %260
        %262 = vrot.lane.b32.xlu0 %v187, 108
        %v263 = vpop.permute.xlu0 %262
        %264 = vrot.lane.b32.xlu0 %v198, 108
        %v265 = vpop.permute.xlu0 %264
        %vm266 = vcmask 883712
        %v267 = vsel %vm266, %v261, %v263
        %v268 = vsel %vm266, %v263, %v265
        %272 = vst [vmem:[#allocation2 + $0x30] sm:$0xf0] %v267
        %273 = vst [vmem:[#allocation2 + $0x38] sm:$0xf0] %v268
        %274 = vst.msk [vmem:[#allocation2 + $0x40] sm:$0xf0] %vm213, %v265
        %275 = vrot.lane.b32.xlu0 %v187, 92
        %v276 = vpop.permute.xlu0 %275
        %277 = vrot.lane.b32.xlu0 %v191, 92
        %v278 = vpop.permute.xlu0 %277
        %279 = vrot.lane.b32.xlu0 %v188, 92
        %v280 = vpop.permute.xlu0 %279
        %vm281 = vcmask 752640
        %v282 = vsel %vm281, %v276, %v278
        %v283 = vsel %vm281, %v278, %v280
        %287 = vst [vmem:[#allocation2 + $0x48] sm:$0xf] %v282
        %288 = vst [vmem:[#allocation2 + $0x50] sm:$0xf] %v283
        %289 = vst.msk [vmem:[#allocation2 + $0x58] sm:$0xf] %vm195, %v280
        %290 = vrot.lane.b32.xlu0 %v197, 91
        %v291 = vpop.permute.xlu0 %290
        %292 = vrot.lane.b32.xlu0 %v187, 91
        %v293 = vpop.permute.xlu0 %292
        %294 = vrot.lane.b32.xlu0 %v198, 91
        %v295 = vpop.permute.xlu0 %294
        %vm296 = vcmask 744448
        %v297 = vsel %vm296, %v291, %v293
        %v298 = vsel %vm296, %v293, %v295
        %302 = vst [vmem:[#allocation2 + $0x48] sm:$0xf0] %v297
        %303 = vst [vmem:[#allocation2 + $0x50] sm:$0xf0] %v298
        %304 = vst.msk [vmem:[#allocation2 + $0x58] sm:$0xf0] %vm213, %v295
        %305 = vrot.lane.b32.xlu0 %v187, 90
        %v306 = vpop.permute.xlu0 %305
        %307 = vrot.lane.b32.xlu0 %v191, 90
        %v308 = vpop.permute.xlu0 %307
        %309 = vrot.lane.b32.xlu0 %v188, 90
        %v310 = vpop.permute.xlu0 %309
        %vm311 = vcmask 736256
        %v312 = vsel %vm311, %v306, %v308
        %v313 = vsel %vm311, %v308, %v310
        %317 = vst [vmem:[#allocation2 + $0x60] sm:$0xf] %v312
        %318 = vst [vmem:[#allocation2 + $0x68] sm:$0xf] %v313
        %319 = vst.msk [vmem:[#allocation2 + $0x70] sm:$0xf] %vm195, %v310
        %vm320 = vcmask 1047808
        %321 = vst.msk [vmem:[#allocation2 + $0x10] sm:$0xff] %vm320, 0.0
        %322 = vst.msk [vmem:[#allocation2 + $0x28] sm:$0xff] %vm320, 0.0
        %323 = vst.msk [vmem:[#allocation2 + $0x40] sm:$0xff] %vm320, 0.0
        %324 = vst.msk [vmem:[#allocation2 + $0x58] sm:$0xff] %vm320, 0.0
        %vm325 = vcmask 1043712
        %326 = vst.msk [vmem:[#allocation2 + $0x70] sm:$0xf] %vm325, 0.0
        %v327 = vld [vmem:[%s1] sm:$0xf]
        %v328 = vld [vmem:[#allocation2] sm:$0xff]
        %v329 = vld [vmem:[#allocation2 + $0x8] sm:$0xff]
        %v330 = vld [vmem:[#allocation2 + $0x10] sm:$0xff]
        %v331 = vld [vmem:[#allocation2 + $0x18] sm:$0xff]
        %v332 = vld [vmem:[#allocation2 + $0x20] sm:$0xff]
        %v333 = vld [vmem:[#allocation2 + $0x28] sm:$0xff]
        %v334 = vld [vmem:[#allocation2 + $0x30] sm:$0xff]
        %v335 = vld [vmem:[#allocation2 + $0x38] sm:$0xff]
        %v336 = vld [vmem:[#allocation2 + $0x40] sm:$0xff]
        %v337 = vld [vmem:[#allocation2 + $0x48] sm:$0xff]
        %v338 = vld [vmem:[#allocation2 + $0x50] sm:$0xff]
        %v339 = vld [vmem:[#allocation2 + $0x58] sm:$0xff]
        %v340 = vld [vmem:[#allocation2 + $0x60] sm:$0xf]
        %v341 = vld [vmem:[#allocation2 + $0x68] sm:$0xf]
        %v342 = vld [vmem:[#allocation2 + $0x70] sm:$0xf]
        %v343 = vld [vmem:[%s2] sm:$0xf]
        %345 = vset.pattern.permute.xlu0 0
        %346 = vperm.xlu0 %345, %v343
        %v347 = vpop.permute.xlu0 %346
        %vm349 = vcmask 293888
        %v351 = vsel %vm349, %v327, 0
        %vm353 = vcmask 1043456
        %v355 = vsel %vm353, %v340, 0
        %v358 = vsel %vm353, %v341, 0
        %v361 = vsel %vm353, %v342, 0
        %363 = vmatprep.subr.mxu0 %v329
        %364 = vmatpush1.msra.mxu0 %v328
        %365 = vmatprep.subr.mxu0 %v332
        %366 = vmatpush1.msra.mxu0 %v331
        %367 = vmatprep.subr.mxu0 %v335
        %368 = vmatpush1.msra.mxu0 %v334
        %369 = vmatprep.subr.mxu0 %v338
        %370 = vmatpush1.msra.mxu0 %v337
        %371 = vmatprep.subr.mxu0 %v358
        %372 = vmatpush1.msra.mxu0 %v355
        %373 = vmatprep.subr.mxu0 0.0
        %374 = vmatpush1.msra.mxu0 0.0
        %375 = vmatprep.subr.mxu0 0.0
        %376 = vmatpush1.msra.mxu0 0.0
        %377 = vmatprep.subr.mxu0 0.0
        %378 = vmatpush1.msra.mxu0 0.0
        %379 = vmatprep.subr.mxu0 0.0
        %380 = vmatpush1.msra.mxu0 0.0
        %381 = vmatprep.subr.mxu0 0.0
        %382 = vmatpush1.msra.mxu0 0.0
        %383 = vmatprep.subr.mxu0 0.0
        %384 = vmatpush1.msra.mxu0 0.0
        %385 = vmatprep.subr.mxu0 0.0
        %386 = vmatpush1.msra.mxu0 0.0
        %387 = vmatprep.subr.mxu0 0.0
        %388 = vmatpush1.msra.mxu0 0.0
        %389 = vmatprep.subr.mxu0 0.0
        %390 = vmatpush1.msra.mxu0 0.0
        %391 = vmatprep.subr.mxu0 0.0
        %392 = vmatpush1.msra.mxu0 0.0
        %393 = vmatprep.subr.mxu0 0.0
        %394 = vmatpush1.msra.mxu0 0.0
        %395 = vmatprep.subr.mxu0 0.0
        %396 = vmatpush1.msra.mxu0 0.0
        %397 = vmatprep.subr.mxu0 0.0
        %398 = vmatpush1.msra.mxu0 0.0
        %399 = vmatprep.subr.mxu0 0.0
        %400 = vmatpush1.msra.mxu0 0.0
        %401 = vmatprep.subr.mxu0 0.0
        %402 = vmatpush1.msra.mxu0 0.0
        %403 = vmatprep.subr.mxu0 0.0
        %404 = vmatpush1.msra.mxu0 0.0
        %405 = vmatprep.subr.mxu0 0.0
        %406 = vmatpush1.msra.mxu0 0.0
        %407 = vmatprep.subr.mxu0 0.0
        %408 = vmatpush1.msra.mxu0 0.0
        %409 = vmatprep.subr.mxu0 0.0
        %410 = vmatpush1.msra.mxu0 0.0
        %411 = vmatprep.subr.mxu0 0.0
        %412 = vmatpush1.msra.mxu0 0.0
        %413 = vmatprep.subr.mxu0 0.0
        %414 = vmatpush1.msra.mxu0 0.0
        %415 = vmatprep.subr.mxu0 0.0
        %416 = vmatpush1.msra.mxu0 0.0
        %417 = vmatprep.subr.mxu0 0.0
        %418 = vmatpush1.msra.mxu0 0.0
        %419 = vmatprep.subr.mxu0 0.0
        %420 = vmatpush1.msra.mxu0 0.0
        %421 = vmatprep.subr.mxu0 0.0
        %422 = vmatpush1.msra.mxu0 0.0
        %423 = vmatprep.subr.mxu0 0.0
        %424 = vmatpush1.msra.mxu0 0.0
        %425 = vmatprep.subr.mxu0 0.0
        %426 = vmatpush1.msra.mxu0 0.0
        %427 = vmatprep.mubr.f32.mxu0 0.0
        %428 = vmatmul.mubr.f32.gmra.mrb[0].mxu0 %v351
        %v429 = vpop.f32.mrb[0].mxu0
        %v430 = vadd.f32 %v347, %v429
        %v431 = vpop.f32.mrb[0].mxu0
        %v432 = vadd.f32 %v347, %v431
        %433 = vdwg.mxu0
        %434 = vmatprep.subr.mxu0 0.0
        %435 = vmatpush1.msra.mxu0 %v330
        %436 = vmatprep.subr.mxu0 0.0
        %437 = vmatpush1.msra.mxu0 %v333
        %438 = vmatprep.subr.mxu0 0.0
        %439 = vmatpush1.msra.mxu0 %v336
        %440 = vmatprep.subr.mxu0 0.0
        %441 = vmatpush1.msra.mxu0 %v339
        %442 = vmatprep.subr.mxu0 0.0
        %443 = vmatpush1.msra.mxu0 %v361
        %444 = vmatprep.subr.mxu0 0.0
        %445 = vmatpush1.msra.mxu0 0.0
        %446 = vmatprep.subr.mxu0 0.0
        %447 = vmatpush1.msra.mxu0 0.0
        %448 = vmatprep.subr.mxu0 0.0
        %449 = vmatpush1.msra.mxu0 0.0
        %450 = vmatprep.subr.mxu0 0.0
        %451 = vmatpush1.msra.mxu0 0.0
        %452 = vmatprep.subr.mxu0 0.0
        %453 = vmatpush1.msra.mxu0 0.0
        %454 = vmatprep.subr.mxu0 0.0
        %455 = vmatpush1.msra.mxu0 0.0
        %456 = vmatprep.subr.mxu0 0.0
        %457 = vmatpush1.msra.mxu0 0.0
        %458 = vmatprep.subr.mxu0 0.0
        %459 = vmatpush1.msra.mxu0 0.0
        %460 = vmatprep.subr.mxu0 0.0
        %461 = vmatpush1.msra.mxu0 0.0
        %462 = vmatprep.subr.mxu0 0.0
        %463 = vmatpush1.msra.mxu0 0.0
        %464 = vmatprep.subr.mxu0 0.0
        %465 = vmatpush1.msra.mxu0 0.0
        %466 = vmatprep.subr.mxu0 0.0
        %467 = vmatpush1.msra.mxu0 0.0
        %468 = vmatprep.subr.mxu0 0.0
        %469 = vmatpush1.msra.mxu0 0.0
        %470 = vmatprep.subr.mxu0 0.0
        %471 = vmatpush1.msra.mxu0 0.0
        %472 = vmatprep.subr.mxu0 0.0
        %473 = vmatpush1.msra.mxu0 0.0
        %474 = vmatprep.subr.mxu0 0.0
        %475 = vmatpush1.msra.mxu0 0.0
        %476 = vmatprep.subr.mxu0 0.0
        %477 = vmatpush1.msra.mxu0 0.0
        %478 = vmatprep.subr.mxu0 0.0
        %479 = vmatpush1.msra.mxu0 0.0
        %480 = vmatprep.subr.mxu0 0.0
        %481 = vmatpush1.msra.mxu0 0.0
        %482 = vmatprep.subr.mxu0 0.0
        %483 = vmatpush1.msra.mxu0 0.0
        %484 = vmatprep.subr.mxu0 0.0
        %485 = vmatpush1.msra.mxu0 0.0
        %486 = vmatprep.subr.mxu0 0.0
        %487 = vmatpush1.msra.mxu0 0.0
        %488 = vmatprep.subr.mxu0 0.0
        %489 = vmatpush1.msra.mxu0 0.0
        %490 = vmatprep.subr.mxu0 0.0
        %491 = vmatpush1.msra.mxu0 0.0
        %492 = vmatprep.subr.mxu0 0.0
        %493 = vmatpush1.msra.mxu0 0.0
        %494 = vmatprep.subr.mxu0 0.0
        %495 = vmatpush1.msra.mxu0 0.0
        %496 = vmatprep.subr.mxu0 0.0
        %497 = vmatpush1.msra.mxu0 0.0
        %498 = vmatprep.mubr.f32.mxu0 0.0
        %499 = vmatmul.mubr.f32.gmra.mrb[0].mxu0 %v351
        %v500 = vpop.f32.mrb[0].mxu0
        %v501 = vadd.f32 %v347, %v500
        %v502 = vpop.f32.mrb[0].mxu0
        %503 = vdwg.mxu0
        %v504 = vmax.f32 %v430, 0.0
        %v505 = vmax.f32 %v432, 0.0
        %v506 = vmax.f32 %v501, 0.0
        %v509 = vcombine.low %v504, %v505
        %511 = vst [vmem:[%s186] sm:$0xff] %v509
        %512 = vst [vmem:[%s186 + $0x8] sm:$0xf] %v506
        %s513 = sand.u32 %s96, 1
        %s514 = scalar_lea.sflag [#allocation5], %s513
        %s515 = sand.u32 %s96, 1
        %s516 = smul.addr %s515, 12
        %s517 = scalar_lea.vmem [#allocation6], %s516
        // Predicated region
        $region37: #{tpu_custom_call.1} parent=31 // pred_check
          %p518 = pneg %p106
        $region38: #{tpu_custom_call.1} parent=31 // pred_check_branch
          %520 = sbr.rel (%p518) target = $region40
        $region39: #{tpu_custom_call.1} parent=31 // pred_region
          %s522 = ssub.s32 192, 192
          %523 = vsyncadd %s514, %s522
          %s524 = smul.addr %s20, 3
          %s525 = smul.addr %s524, 64
          %s526 = scalar_lea.hbm %s3, %s525
          %s528 = sshll.u32 %s517, 4
          %s529 = int_to_ptr.vmem [resolvable:$true] %s528
          %531 = dma.vmem_to_hbm [thread:$0]  %s529, 192, %s526, %s514
        $region40: #{tpu_custom_call.1} parent=31 // pred_fallthru
          _
      $region32: #{tpu_custom_call.1} parent=5 // pred_fallthru
        _
      %p532 = scmp.le.s32.totalorder 2, %s15
      // Predicated region
      $region41: #{tpu_custom_call.1} parent=5 // pred_check
        %p533 = pneg %p532
      $region42: #{tpu_custom_call.1} parent=5 // pred_check_branch
        %535 = sbr.rel (%p533) target = $region44
      $region43: #{tpu_custom_call.1} parent=5 // pred_region
        %s536 = ssub.s32 %s15, 2
        // Predicated region
        $region45: #{tpu_custom_call.1} parent=43 // pred_check
          %p537 = pneg %p112
        $region46: #{tpu_custom_call.1} parent=43 // pred_check_branch
          %539 = sbr.rel (%p537) target = $region48
        $region47: #{tpu_custom_call.1} parent=43 // pred_region
          %s540 = sand.u32 %s97, 1
          %s541 = scalar_lea.sflag [#allocation5], %s540
          %s542 = sand.u32 %s97, 1
          %s543 = smul.addr %s542, 12
          %s544 = scalar_lea.vmem [#allocation6], %s543
          %545 = dma.done %s541, 192
        $region48: #{tpu_custom_call.1} parent=43 // pred_fallthru
          _
      $region44: #{tpu_custom_call.1} parent=5 // pred_fallthru
        _
    $region6: #{tpu_custom_call.1} parent=1 // loop_footer
      %s19 = sadd.s32 1, %s15
    $region7: #{tpu_custom_call.1} parent=1 // loop_footer_branch
      %14 = sbr.rel target = $region3
    $region8: #{tpu_custom_call.1} parent=1 // loop_exit
      _
    %546 = vsyncpa [#allocation4], 1
    %s547 = scalar_lea.sflag [#allocation4], 1
    %548 = vsyncpa %s547, 1
    %549 = vsyncpa [#allocation5], 1
    %s550 = scalar_lea.sflag [#allocation5], 1
    %551 = vsyncpa %s550, 1

</llo_original>
